<compile_context>
chip_gen: v7x
topology: tpu7x:2x2x1
jax: 0.10.0
libtpu: 0.0.40
codegen_flags: <defaults>
</compile_context>

<pallas_src>
import jax
import jax.numpy as jnp
from jax.experimental import pallas as pl
from jax.experimental.pallas import tpu as pltpu


# ---------------------------------------------------------------------------
# Helpers
# ---------------------------------------------------------------------------

def _round_up(v, m):
    return ((v + m - 1) // m) * m


def _vmem_config():
    """Generation-aware (VMEM budget for operand residency, vmem_limit_bytes)."""
    try:
        phys = int(getattr(pltpu.get_tpu_info(), "vmem_capacity_bytes", 0)) or None
    except Exception:
        phys = None
    if phys is None:
        phys = 64 * 1024 * 1024          # conservative (v7x per-TC)
    limit = min(100 * 1024 * 1024, max(32 * 1024 * 1024, (phys * 3) // 4))
    budget = min(80 * 1024 * 1024, (phys * 5) // 8)
    return budget, limit


def _tile_candidates(dim, align):
    """Tile sizes for `dim`: the full dim (always a legal block dim), then
    `align`-aligned proper divisors, descending.  Trace-time only."""
    cands = [dim]
    d = (dim // align) * align
    while d >= align:
        if d != dim and dim % d == 0:
            cands.append(d)
        d -= align
    return cands


def _choose_tiles(M, T, nf, x_bytes, w_bytes, out_bytes, budget, sub_align):
    tm_cands = _tile_candidates(M, sub_align)
    tn_cands = _tile_candidates(T, 128)

    def single_k_bytes(tm, tn):
        return (2 * tm * nf * x_bytes        # x double buffer
                + 2 * nf * tn * w_bytes      # weight double buffer
                + 2 * tm * tn * out_bytes    # output double buffer
                + 2 * tn * 4)                # bias

    # Path 1: full-nf contraction block -> no accumulator, no padding, and the
    # resident operand is read from HBM exactly once.
    for tn in tn_cands:
        for tm in tm_cands:
            if single_k_bytes(tm, tn) <= budget:
                return {"mode": "single_k", "tm": tm, "tn": tn, "tk": nf, "pad_k": 0}

    # Path 2: tile the nf reduction with an f32 VMEM accumulator.
    K_eff = nf if nf % 128 == 0 else _round_up(nf, 128)
    tk_cands = _tile_candidates(K_eff, 128)

    def tiled_k_bytes(tm, tn, tk):
        return (2 * tm * tk * x_bytes + 2 * tk * tn * w_bytes
                + 2 * tm * tn * out_bytes + tm * tn * 4 + 2 * tn * 4)

    for tn in tn_cands:
        for tm in tm_cands:
            for tk in tk_cands:
                if tiled_k_bytes(tm, tn, tk) <= budget:
                    return {"mode": "tiled_k", "tm": tm, "tn": tn, "tk": tk,
                            "pad_k": K_eff - nf}

    # Nothing fits the requested budget: smallest legal tiles; vmem_limit_bytes
    # absorbs any overshoot.
    return {"mode": "tiled_k", "tm": tm_cands[-1], "tn": tn_cands[-1],
            "tk": tk_cands[-1], "pad_k": K_eff - nf}


# ---------------------------------------------------------------------------
# Kernels
# ---------------------------------------------------------------------------

def _flatten_head_single_k_kernel(x_ref, w_ref, b_ref, o_ref):
    # x_ref: (tm, nf)  activation tile (native dtype, cast in-kernel if needed)
    # w_ref: (nf, tn)  pre-transposed weight tile (compute dtype)
    # b_ref: (1, tn)   f32 bias tile
    # o_ref: (tm, tn)  output tile
    x = x_ref[...]
    w = w_ref[...]
    if x.dtype != w.dtype:               # in-kernel cast (VPU work hidden under DMA)
        x = x.astype(w.dtype)
    acc = jnp.dot(x, w, preferred_element_type=jnp.float32)
    o_ref[...] = (acc + b_ref[...]).astype(o_ref.dtype)


def _flatten_head_tiled_k_kernel(x_ref, w_ref, b_ref, o_ref, acc_ref):
    # Same as above but the nf reduction is split over grid axis 2 with an f32
    # VMEM accumulator (init at k==0, bias + store at k==last).
    k = pl.program_id(2)

    @pl.when(k == 0)
    def _init():
        acc_ref[...] = jnp.zeros_like(acc_ref)

    x = x_ref[...]
    w = w_ref[...]
    if x.dtype != w.dtype:
        x = x.astype(w.dtype)
    acc_ref[...] += jnp.dot(x, w, preferred_element_type=jnp.float32)

    @pl.when(k == pl.num_programs(2) - 1)
    def _finalize():
        o_ref[...] = (acc_ref[...] + b_ref[...]).astype(o_ref.dtype)


# ---------------------------------------------------------------------------
# Wrapper
# ---------------------------------------------------------------------------

def prepare_flatten_head_params(weight, bias, compute_dtype=None):
    """One-time parameter preprocessing (call once, outside the hot path).

    * Transposes the PyTorch (out, in) Linear weight to (nf, target_window) so
      the kernel's MXU contraction is K-major (no per-step transpose and no
      per-call HBM transpose).
    * Optionally casts the weight to `compute_dtype` (e.g. bf16) — halves
      weight HBM bandwidth on v6e/v7x; accumulation stays f32.
    * Bias kept in f32, shaped (1, T) for in-kernel broadcast.
    """
    w_kt = weight.T
    if compute_dtype is not None:
        w_kt = w_kt.astype(compute_dtype)
    b2d = bias.astype(jnp.float32).reshape(1, -1)
    return w_kt, b2d


def flatten_head_forward(x, w_kt, bias2d, *, vmem_budget_bytes=None,
                         vmem_limit_bytes=None):
    """x: (B, n_vars, d_model, patch_num); w_kt: (nf, T) prepared weight; bias2d: (1, T)."""
    B, n_vars, d_model, patch_num = x.shape
    nf = d_model * patch_num
    nf_w, T = w_kt.shape
    assert nf_w == nf, "prepared weight must have shape (nf, target_window)"
    assert bias2d.shape == (1, T)

    M = B * n_vars
    # nn.Flatten(start_dim=-2) + row flattening: contiguous reshape — no copy, no cast.
    x2d = x.reshape(M, nf)

    x_bytes = x.dtype.itemsize
    w_bytes = w_kt.dtype.itemsize
    out_bytes = x.dtype.itemsize
    sub_align = 8 if x_bytes >= 4 else 16    # sublane alignment for x blocks

    budget_d, limit_d = _vmem_config()
    budget = budget_d if vmem_budget_bytes is None else vmem_budget_bytes
    limit = limit_d if vmem_limit_bytes is None else vmem_limit_bytes

    plan = _choose_tiles(M, T, nf, x_bytes, w_bytes, out_bytes, budget, sub_align)
    tm, tn, tk = plan["tm"], plan["tn"], plan["tk"]
    K_eff = nf + plan["pad_k"]

    if plan["pad_k"]:
        # Rare fallback: nf is not a 128-multiple AND the full-nf block doesn't fit
        # VMEM, so the reduction must be tiled -> zero-pad the contraction axis.
        # TODO(synk): hoist this pad of the weight into prepare_flatten_head_params
        # for deployments that always hit this path (it is a per-call HBM copy here).
        x2d = jnp.pad(x2d, ((0, 0), (0, plan["pad_k"])))
        w_kt = jnp.pad(w_kt, ((0, plan["pad_k"]), (0, 0)))

    I = M // tm
    J = T // tn

    # Resident-operand choice: larger operand keeps a constant block index across the
    # inner sweep (read from HBM once); the smaller one is re-streamed.
    w_is_resident = (T * w_bytes) >= (M * x_bytes)

    # v7x has 2 TensorCores: guarantee >= 2 blocks along a "parallel" axis when it can
    # be done without extra HBM traffic (split the inner, re-streamed axis in half).
    if plan["mode"] == "single_k" and I * J == 1:
        if w_is_resident:
            if M % 2 == 0 and (M // 2) % sub_align == 0:
                tm = M // 2
                I = 2
        else:
            if T % 2 == 0 and (T // 2) % 128 == 0:
                tn = T // 2
                J = 2

    if plan["mode"] == "single_k":
        kernel = _flatten_head_single_k_kernel
        scratch = []
        dims = ("parallel", "parallel")
        if w_is_resident:
            grid = (J, I)
            x_map = lambda j, i: (i, 0)
            w_map = lambda j, i: (0, j)
            b_map = lambda j, i: (0, j)
            o_map = lambda j, i: (i, j)
        else:
            grid = (I, J)
            x_map = lambda i, j: (i, 0)
            w_map = lambda i, j: (0, j)
            b_map = lambda i, j: (0, j)
            o_map = lambda i, j: (i, j)
        in_specs = [
            pl.BlockSpec((tm, K_eff), x_map),    # activation
            pl.BlockSpec((K_eff, tn), w_map),    # weight (nf, T) — K-major, no transpose
            pl.BlockSpec((1, tn), b_map),        # bias
        ]
        out_spec = pl.BlockSpec((tm, tn), o_map)
        x_reads, w_reads = (J, 1) if w_is_resident else (1, I)
    else:
        kernel = _flatten_head_tiled_k_kernel
        scratch = [pltpu.VMEM((tm, tn), jnp.float32)]
        dims = ("parallel", "parallel", "arbitrary")
        KB = K_eff // tk
        if w_is_resident:
            grid = (J, I, KB)
            x_map = lambda j, i, k: (i, k)
            w_map = lambda j, i, k: (k, j)
            b_map = lambda j, i, k: (0, j)
            o_map = lambda j, i, k: (i, j)
        else:
            grid = (I, J, KB)
            x_map = lambda i, j, k: (i, k)
            w_map = lambda i, j, k: (k, j)
            b_map = lambda i, j, k: (0, j)
            o_map = lambda i, j, k: (i, j)
        in_specs = [
            pl.BlockSpec((tm, tk), x_map),
            pl.BlockSpec((tk, tn), w_map),
            pl.BlockSpec((1, tn), b_map),
        ]
        out_spec = pl.BlockSpec((tm, tn), o_map)
        x_reads, w_reads = J, I

    cost = pl.CostEstimate(
        flops=2 * M * K_eff * T,
        bytes_accessed=(x_reads * M * K_eff * x_bytes
                        + w_reads * K_eff * T * w_bytes
                        + M * T * out_bytes + T * 4),
        transcendentals=0,
    )

    out2d = pl.pallas_call(
        kernel,
        out_shape=jax.ShapeDtypeStruct((M, T), x.dtype),
        grid_spec=pltpu.PrefetchScalarGridSpec(
            num_scalar_prefetch=0,
            grid=grid,
            in_specs=in_specs,
            out_specs=out_spec,
            scratch_shapes=scratch,
        ),
        compiler_params=pltpu.CompilerParams(
            dimension_semantics=dims,
            vmem_limit_bytes=limit,
        ),
        cost_estimate=cost,
    )(x2d, w_kt, bias2d)

    # TODO(synk): nn.Dropout(head_dropout) omitted — identity for p=0 / eval mode.
    return out2d.reshape(B, n_vars, T)


# ---------------------------------------------------------------------------
# Self-test
# ---------------------------------------------------------------------------

if __name__ == "__main__":
    # Small shapes consistent with the module's forward.
    B, n_vars, d_model, patch_num = 2, 4, 16, 16
    nf = d_model * patch_num            # 256
    target_window = 192                 # a real TimeLLM horizon; not a 128-multiple

    key = jax.random.PRNGKey(0)
    kx, kw, kb = jax.random.split(key, 3)

    x = jax.random.normal(kx, (B, n_vars, d_model, patch_num), dtype=jnp.float32)
    # Deterministic Linear parameters (PyTorch nn.Linear shapes: (out, in), (out,)).
    bound = 1.0 / (nf ** 0.5)
    weight = jax.random.uniform(kw, (target_window, nf), jnp.float32, -bound, bound)
    bias = jax.random.uniform(kb, (target_window,), jnp.float32, -bound, bound)

    ref = x.reshape(B, n_vars, nf) @ weight.T + bias

    # One-time parameter preprocessing (weight -> (nf, T), bias -> (1, T) f32).
    w_kt, b2d = prepare_flatten_head_params(weight, bias)

    # Path 1: full-nf contraction block, weight resident, no accumulator, no padding.
    out = jax.block_until_ready(flatten_head_forward(x, w_kt, b2d))
    assert out.shape == (B, n_vars, target_window)
    assert jnp.allclose(out, ref, atol=1e-5, rtol=1e-5)

    # Path 2: force a tiny VMEM budget -> exercises the K-tiled accumulator kernel
    # (grid has 2 reduction steps for nf=256 with tk=128); same math, same result.
    out_tiled = jax.block_until_ready(
        flatten_head_forward(x, w_kt, b2d, vmem_budget_bytes=64 * 1024))
    assert jnp.allclose(out_tiled, ref, atol=1e-5, rtol=1e-5)

    print("KERNEL_OK")
</pallas_src>

<mosaic_0001>
module attributes {stable_mosaic.version = 11 : i64} {
  func.func @_flatten_head_single_k_kernel(%arg0: i32, %arg1: i32, %arg2: memref<8x256xf32, #tpu.memory_space<vmem>>, %arg3: memref<256x192xf32, #tpu.memory_space<vmem>>, %arg4: memref<1x192xf32, #tpu.memory_space<vmem>>, %arg5: memref<8x192xf32, #tpu.memory_space<vmem>>) attributes {dimension_semantics = [#tpu.dimension_semantics<parallel>, #tpu.dimension_semantics<parallel>], iteration_bounds = array<i64: 1, 1>, scalar_prefetch = 0 : i64, scratch_operands = 0 : i64, tpu.core_type = #tpu.core_type<tc>, window_params = [{transform_indices = @transform_0, window_bounds = array<i64: 8, 256>}, {transform_indices = @transform_1, window_bounds = array<i64: 256, 192>}, {transform_indices = @transform_2, window_bounds = array<i64: 1, 192>}, {transform_indices = @transform_3, window_bounds = array<i64: 8, 192>}]} {
    %c0 = arith.constant 0 : index
    %c0_0 = arith.constant 0 : index
    %0 = vector.load %arg2[%c0, %c0_0] : memref<8x256xf32, #tpu.memory_space<vmem>>, vector<8x256xf32>
    %c0_1 = arith.constant 0 : index
    %c0_2 = arith.constant 0 : index
    %1 = vector.load %arg3[%c0_1, %c0_2] : memref<256x192xf32, #tpu.memory_space<vmem>>, vector<256x192xf32>
    %cst = arith.constant dense<0.000000e+00> : vector<8x192xf32>
    %2 = tpu.matmul %0, %1, %cst {dimension_numbers = #tpu.dot_dimension_numbers<[1], [0], [0], [1], [0, 0, 1, 1], [], []>} : vector<8x256xf32>, vector<256x192xf32>, vector<8x192xf32> -> vector<8x192xf32>
    %c0_3 = arith.constant 0 : index
    %c0_4 = arith.constant 0 : index
    %3 = vector.load %arg4[%c0_3, %c0_4] : memref<1x192xf32, #tpu.memory_space<vmem>>, vector<1x192xf32>
    %4 = vector.broadcast %3 : vector<1x192xf32> to vector<8x192xf32>
    %5 = arith.addf %2, %4 : vector<8x192xf32>
    %c0_5 = arith.constant 0 : index
    %c0_6 = arith.constant 0 : index
    %6 = vector.load %arg5[%c0_5, %c0_6] : memref<8x192xf32, #tpu.memory_space<vmem>>, vector<8x192xf32>
    tpu.vector_store %arg5[%c0_5, %c0_6], %5 {strides = array<i32>} : memref<8x192xf32, #tpu.memory_space<vmem>>, vector<8x192xf32>,
    return
  }
  func.func @transform_0(%arg0: i32, %arg1: i32) -> (i32, i32) {
    %c0_i32 = arith.constant 0 : i32
    %c0_i32_0 = arith.constant 0 : i32
    return %arg1, %c0_i32 : i32, i32
  }
  func.func @transform_1(%arg0: i32, %arg1: i32) -> (i32, i32) {
    %c0_i32 = arith.constant 0 : i32
    %c0_i32_0 = arith.constant 0 : i32
    return %c0_i32, %arg0 : i32, i32
  }
  func.func @transform_2(%arg0: i32, %arg1: i32) -> (i32, i32) {
    %c0_i32 = arith.constant 0 : i32
    %c0_i32_0 = arith.constant 0 : i32
    return %c0_i32, %arg0 : i32, i32
  }
  func.func @transform_3(%arg0: i32, %arg1: i32) -> (i32, i32) {
    %c0_i32 = arith.constant 0 : i32
    return %arg1, %arg0 : i32, i32
  }
}

</mosaic_0001>

<llo_original>
// kernel: tpu_custom_call.1
$region0: #{tpu_custom_call.1}
  #allocation0 [shape = 'u32[]', space=smem, size = 0x4, offset = 0x4, fixed_abs, tag = 'smem constant byte address 0x4 - core index']
  #allocation1 [shape = 'u32[144,128]{1,0:T(1,128)}', space=vmem, size = 0x12000, scoped, tag = 'internal scratch']
  %s0 = inlined_call_operand.vmem [shape: f32[8,256], index: 0, kind: input, shape index: {}]
  %s1 = inlined_call_operand.vmem [shape: f32[256,192], index: 1, kind: input, shape index: {}]
  %s2 = inlined_call_operand.vmem [shape: f32[1,192], index: 2, kind: input, shape index: {}]
  %s3 = inlined_call_operand.hbm [shape: f32[8,192], index: 3, kind: output, shape index: {}]
  %s4 = sld [smem:[#allocation0]]
  $region22: #{tpu_custom_call.1} parent=0
    _
  %s6 = ssub.s32 1, %s4
  %s7 = scalar_select 0, %s6, %s4
  $region1: #{tpu_custom_call.1} parent=0
    #allocation2 [shape = 'u8[8192]{0}', space=vmem, size = 0x2000, scoped, tag = 'output window, operand 0, single buffered']
    #allocation3 [shape = 's32[1]{0}', space=sflag, size = 0x4, scoped, tag = 'scoped memory for tpu_custom_call.1']
    %8 = vsyncpa [#allocation3], 0
    // Predicated region
    $region2: #{tpu_custom_call.1} parent=1 // pred_check
      _
    $region3: #{tpu_custom_call.1} parent=1 // pred_check_branch
      %10 = sbr.rel (0) target = $region5
    $region4: #{tpu_custom_call.1} parent=1 // pred_region
      _
    $region5: #{tpu_custom_call.1} parent=1 // pred_fallthru
      _
    // Predicated region
    $region6: #{tpu_custom_call.1} parent=1 // pred_check
      _
    $region7: #{tpu_custom_call.1} parent=1 // pred_check_branch
      %12 = sbr.rel (0) target = $region9
    $region8: #{tpu_custom_call.1} parent=1 // pred_region
      _
    $region9: #{tpu_custom_call.1} parent=1 // pred_fallthru
      _
    // Predicated region
    $region10: #{tpu_custom_call.1} parent=1 // pred_check
      _
    $region11: #{tpu_custom_call.1} parent=1 // pred_check_branch
      %14 = sbr.rel (0) target = $region13
    $region12: #{tpu_custom_call.1} parent=1 // pred_region
      _
    $region13: #{tpu_custom_call.1} parent=1 // pred_fallthru
      _
    %v15 = vld [vmem:[%s0] sm:$0xff]
    %v16 = vld [vmem:[%s0 + $0x8] sm:$0xff]
    %v17 = vld [vmem:[%s1] sm:$0xff]
    %v18 = vld [vmem:[%s1 + $0x8] sm:$0xff]
    %v19 = vld [vmem:[%s1 + $0x10] sm:$0xff]
    %v20 = vld [vmem:[%s1 + $0x18] sm:$0xff]
    %v21 = vld [vmem:[%s1 + $0x20] sm:$0xff]
    %v22 = vld [vmem:[%s1 + $0x28] sm:$0xff]
    %v23 = vld [vmem:[%s1 + $0x30] sm:$0xff]
    %v24 = vld [vmem:[%s1 + $0x38] sm:$0xff]
    %v25 = vld [vmem:[%s1 + $0x40] sm:$0xff]
    %v26 = vld [vmem:[%s1 + $0x48] sm:$0xff]
    %v27 = vld [vmem:[%s1 + $0x50] sm:$0xff]
    %v28 = vld [vmem:[%s1 + $0x58] sm:$0xff]
    %v29 = vld [vmem:[%s1 + $0x60] sm:$0xff]
    %v30 = vld [vmem:[%s1 + $0x68] sm:$0xff]
    %v31 = vld [vmem:[%s1 + $0x70] sm:$0xff]
    %v32 = vld [vmem:[%s1 + $0x78] sm:$0xff]
    %v33 = vld [vmem:[%s1 + $0x80] sm:$0xff]
    %v34 = vld [vmem:[%s1 + $0x88] sm:$0xff]
    %v35 = vld [vmem:[%s1 + $0x90] sm:$0xff]
    %v36 = vld [vmem:[%s1 + $0x98] sm:$0xff]
    %v37 = vld [vmem:[%s1 + $0xa0] sm:$0xff]
    %v38 = vld [vmem:[%s1 + $0xa8] sm:$0xff]
    %v39 = vld [vmem:[%s1 + $0xb0] sm:$0xff]
    %v40 = vld [vmem:[%s1 + $0xb8] sm:$0xff]
    %v41 = vld [vmem:[%s1 + $0xc0] sm:$0xff]
    %v42 = vld [vmem:[%s1 + $0xc8] sm:$0xff]
    %v43 = vld [vmem:[%s1 + $0xd0] sm:$0xff]
    %v44 = vld [vmem:[%s1 + $0xd8] sm:$0xff]
    %v45 = vld [vmem:[%s1 + $0xe0] sm:$0xff]
    %v46 = vld [vmem:[%s1 + $0xe8] sm:$0xff]
    %v47 = vld [vmem:[%s1 + $0xf0] sm:$0xff]
    %v48 = vld [vmem:[%s1 + $0xf8] sm:$0xff]
    %v49 = vld [vmem:[%s1 + $0x100] sm:$0xff]
    %v50 = vld [vmem:[%s1 + $0x108] sm:$0xff]
    %v51 = vld [vmem:[%s1 + $0x110] sm:$0xff]
    %v52 = vld [vmem:[%s1 + $0x118] sm:$0xff]
    %v53 = vld [vmem:[%s1 + $0x120] sm:$0xff]
    %v54 = vld [vmem:[%s1 + $0x128] sm:$0xff]
    %v55 = vld [vmem:[%s1 + $0x130] sm:$0xff]
    %v56 = vld [vmem:[%s1 + $0x138] sm:$0xff]
    %v57 = vld [vmem:[%s1 + $0x140] sm:$0xff]
    %v58 = vld [vmem:[%s1 + $0x148] sm:$0xff]
    %v59 = vld [vmem:[%s1 + $0x150] sm:$0xff]
    %v60 = vld [vmem:[%s1 + $0x158] sm:$0xff]
    %v61 = vld [vmem:[%s1 + $0x160] sm:$0xff]
    %v62 = vld [vmem:[%s1 + $0x168] sm:$0xff]
    %v63 = vld [vmem:[%s1 + $0x170] sm:$0xff]
    %v64 = vld [vmem:[%s1 + $0x178] sm:$0xff]
    %v65 = vld [vmem:[%s1 + $0x180] sm:$0xff]
    %v66 = vld [vmem:[%s1 + $0x188] sm:$0xff]
    %v67 = vld [vmem:[%s1 + $0x190] sm:$0xff]
    %v68 = vld [vmem:[%s1 + $0x198] sm:$0xff]
    %v69 = vld [vmem:[%s1 + $0x1a0] sm:$0xff]
    %v70 = vld [vmem:[%s1 + $0x1a8] sm:$0xff]
    %v71 = vld [vmem:[%s1 + $0x1b0] sm:$0xff]
    %v72 = vld [vmem:[%s1 + $0x1b8] sm:$0xff]
    %v73 = vld [vmem:[%s1 + $0x1c0] sm:$0xff]
    %v74 = vld [vmem:[%s1 + $0x1c8] sm:$0xff]
    %v75 = vld [vmem:[%s1 + $0x1d0] sm:$0xff]
    %v76 = vld [vmem:[%s1 + $0x1d8] sm:$0xff]
    %v77 = vld [vmem:[%s1 + $0x1e0] sm:$0xff]
    %v78 = vld [vmem:[%s1 + $0x1e8] sm:$0xff]
    %v79 = vld [vmem:[%s1 + $0x1f0] sm:$0xff]
    %v80 = vld [vmem:[%s1 + $0x1f8] sm:$0xff]
    %v81 = vld [vmem:[%s2] sm:$0x3]
    %v83 = vlaneseq
    %v84 = vshrl.u32 %v83, 7
    %v85 = vsub.s32 0, %v84
    %v86 = vrot.slane %v81, %v85
    %v87 = vlaneseq
    %v88 = vshrl.u32 %v87, 7
    %v89 = vsub.s32 1, %v88
    %v90 = vrot.slane %v81, %v89
    %93 = vmatprep.subr.mxu0 %v18
    %94 = vmatpush1.msra.mxu0 %v17
    %95 = vmatprep.subr.mxu0 %v20
    %96 = vmatpush1.msra.mxu0 %v19
    %97 = vmatprep.subr.mxu0 %v22
    %98 = vmatpush1.msra.mxu0 %v21
    %99 = vmatprep.subr.mxu0 %v24
    %100 = vmatpush1.msra.mxu0 %v23
    %101 = vmatprep.subr.mxu0 %v26
    %102 = vmatpush1.msra.mxu0 %v25
    %103 = vmatprep.subr.mxu0 %v28
    %104 = vmatpush1.msra.mxu0 %v27
    %105 = vmatprep.subr.mxu0 %v30
    %106 = vmatpush1.msra.mxu0 %v29
    %107 = vmatprep.subr.mxu0 %v32
    %108 = vmatpush1.msra.mxu0 %v31
    %109 = vmatprep.subr.mxu0 %v34
    %110 = vmatpush1.msra.mxu0 %v33
    %111 = vmatprep.subr.mxu0 %v36
    %112 = vmatpush1.msra.mxu0 %v35
    %113 = vmatprep.subr.mxu0 %v38
    %114 = vmatpush1.msra.mxu0 %v37
    %115 = vmatprep.subr.mxu0 %v40
    %116 = vmatpush1.msra.mxu0 %v39
    %117 = vmatprep.subr.mxu0 %v42
    %118 = vmatpush1.msra.mxu0 %v41
    %119 = vmatprep.subr.mxu0 %v44
    %120 = vmatpush1.msra.mxu0 %v43
    %121 = vmatprep.subr.mxu0 %v46
    %122 = vmatpush1.msra.mxu0 %v45
    %123 = vmatprep.subr.mxu0 %v48
    %124 = vmatpush1.msra.mxu0 %v47
    %125 = vmatprep.subr.mxu0 %v50
    %126 = vmatpush1.msra.mxu0 %v49
    %127 = vmatprep.subr.mxu0 %v52
    %128 = vmatpush1.msra.mxu0 %v51
    %129 = vmatprep.subr.mxu0 %v54
    %130 = vmatpush1.msra.mxu0 %v53
    %131 = vmatprep.subr.mxu0 %v56
    %132 = vmatpush1.msra.mxu0 %v55
    %133 = vmatprep.subr.mxu0 %v58
    %134 = vmatpush1.msra.mxu0 %v57
    %135 = vmatprep.subr.mxu0 %v60
    %136 = vmatpush1.msra.mxu0 %v59
    %137 = vmatprep.subr.mxu0 %v62
    %138 = vmatpush1.msra.mxu0 %v61
    %139 = vmatprep.subr.mxu0 %v64
    %140 = vmatpush1.msra.mxu0 %v63
    %141 = vmatprep.subr.mxu0 %v66
    %142 = vmatpush1.msra.mxu0 %v65
    %143 = vmatprep.subr.mxu0 %v68
    %144 = vmatpush1.msra.mxu0 %v67
    %145 = vmatprep.subr.mxu0 %v70
    %146 = vmatpush1.msra.mxu0 %v69
    %147 = vmatprep.subr.mxu0 %v72
    %148 = vmatpush1.msra.mxu0 %v71
    %149 = vmatprep.subr.mxu0 %v74
    %150 = vmatpush1.msra.mxu0 %v73
    %151 = vmatprep.subr.mxu0 %v76
    %152 = vmatpush1.msra.mxu0 %v75
    %153 = vmatprep.subr.mxu0 %v78
    %154 = vmatpush1.msra.mxu0 %v77
    %155 = vmatprep.subr.mxu0 %v80
    %156 = vmatpush1.msra.mxu0 %v79
    %157 = vmatprep.mubr.f32.mxu0 %v16
    %158 = vmatmul.mubr.f32.gmra.mrb[0].mxu0 %v15
    %v159 = vpop.f32.mrb[0].mxu0
    %v160 = vadd.f32 %v86, %v159
    %v161 = vpop.f32.mrb[0].mxu0
    %v162 = vadd.f32 %v90, %v161
    %163 = vdwg.mxu0
    %164 = vst [vmem:[#allocation2] sm:$0xff] %v160
    %vm165 = vcmask 523264
    %166 = vst.msk [vmem:[#allocation2 + $0x8] sm:$0xff] %vm165, %v162
    // Predicated region
    $region14: #{tpu_custom_call.1} parent=1 // pred_check
      _
    $region15: #{tpu_custom_call.1} parent=1 // pred_check_branch
      %168 = sbr.rel (0) target = $region17
    $region16: #{tpu_custom_call.1} parent=1 // pred_region
      %s170 = ssub.s32 256, 256
      %171 = vsyncadd [#allocation3], %s170
      %s173 = sshll.u32 [#allocation2], 4
      %s174 = int_to_ptr.vmem [resolvable:$true] %s173
      %176 = dma.vmem_to_hbm [thread:$0]  %s174, 256, %s3, [#allocation3]
    $region17: #{tpu_custom_call.1} parent=1 // pred_fallthru
      _
    // Predicated region
    $region18: #{tpu_custom_call.1} parent=1 // pred_check
      _
    $region19: #{tpu_custom_call.1} parent=1 // pred_check_branch
      %178 = sbr.rel (0) target = $region21
    $region20: #{tpu_custom_call.1} parent=1 // pred_region
      %179 = dma.done [#allocation3], 256
    $region21: #{tpu_custom_call.1} parent=1 // pred_fallthru
      _
    %180 = vsyncpa [#allocation3], 1

</llo_original>
